<compile_context>
chip_gen: v5e
topology: v5e:2x2
jax: 0.10.0
libtpu: 0.0.40
codegen_flags: <defaults>
</compile_context>

<pallas_src>
import jax
import jax.numpy as jnp
from jax import lax
from jax.experimental import pallas as pl
from jax.experimental.pallas import tpu as pltpu

DIM = 144        # attention / fc1 input dim (original)
PDIM = 256       # DIM zero-padded to a multiple of 128 (native MXU width)
HIDDEN = 256     # fc1 output dim
N_QUBITS = 4     # quantum layer width
OUT_DIM = 15     # fc2 output dim (reshaped to (-1, 5, 3))
OUT_PAD = 128    # lane-dense padded output width
SCALE = DIM ** (-0.5)


def qattn_kernel(x_ref, wqkv_ref, bqkv_ref, w1_ref, b1_ref, w2_ref, b2_ref,
                 o_ref):
    x = x_ref[...]                                                 # (B, 256) bf16

    # --- fused Q/K/V projection: one bf16 matmul, f32 accumulation ---
    qkv = jnp.dot(x, wqkv_ref[...],
                  preferred_element_type=jnp.float32) + bqkv_ref[...]   # (B, 768)
    q = qkv[:, 0 * PDIM:1 * PDIM]                                  # 128-aligned slabs
    k = qkv[:, 1 * PDIM:2 * PDIM]
    v = qkv[:, 2 * PDIM:3 * PDIM]

    # --- attention over the batch axis (matches the PyTorch module on (B,144)) ---
    scores = lax.dot_general(q, k, (((1,), (1,)), ((), ())),
                             preferred_element_type=jnp.float32) * SCALE  # (B, B)
    m = jnp.max(scores, axis=-1, keepdims=True)
    e = jnp.exp(scores - m)
    w = e * pl.reciprocal(jnp.sum(e, axis=-1, keepdims=True), approx=False)
    a = jnp.dot(w, v, preferred_element_type=jnp.float32)                 # (B, 256)

    # --- fc1 + relu (bf16 MXU inputs, f32 accumulation) ---
    h = jnp.dot(a.astype(jnp.bfloat16), w1_ref[...],
                preferred_element_type=jnp.float32) + b1_ref[...]
    h = jnp.maximum(h, 0.0)                                               # (B, 256)

    # --- QuantumLayer(4 qubits, 1 layer): exact analytic <Z_i> = cumprod cos ---
    c = jnp.cos(h[:, :N_QUBITS])                                          # (B, 4)
    q0 = c[:, 0:1]
    q1 = q0 * c[:, 1:2]
    q2 = q1 * c[:, 2:3]
    q3 = q2 * c[:, 3:4]

    # --- fc2 as 4 broadcast FMAs against rows of the padded (8,128) weight ---
    w2 = w2_ref[...]                                                      # (8, 128)
    y = (b2_ref[...]
         + q0 * w2[0:1, :] + q1 * w2[1:2, :]
         + q2 * w2[2:3, :] + q3 * w2[3:4, :])                             # (B, 128)
    o_ref[...] = y


def init_params(key):
    """Deterministic PyTorch-Linear-style init (uniform +/- 1/sqrt(fan_in))."""
    ks = jax.random.split(key, 5)

    def linear(k, fan_in, fan_out):
        kw, kb = jax.random.split(k)
        bound = 1.0 / (fan_in ** 0.5)
        w = jax.random.uniform(kw, (fan_out, fan_in), jnp.float32, -bound, bound)
        b = jax.random.uniform(kb, (fan_out,), jnp.float32, -bound, bound)
        return w, b

    wq, bq = linear(ks[0], DIM, DIM)
    wk, bk = linear(ks[1], DIM, DIM)
    wv, bv = linear(ks[2], DIM, DIM)
    w1, b1 = linear(ks[3], DIM, HIDDEN)
    w2, b2 = linear(ks[4], N_QUBITS, OUT_DIM)
    # QuantumLayer.q_weights exist in the module but cannot affect the PauliZ
    # expectations (RZ = pure phase, CNOT = basis permutation) -> not materialized.
    return dict(wq=wq, bq=bq, wk=wk, bk=bk, wv=wv, bv=bv,
                w1=w1, b1=b1, w2=w2, b2=b2)


def prepare_params(p):
    """One-time kernel layout prep: transpose to (in,out), pad to 128-multiples,
    fuse QKV, cast big weights to bf16.  No per-call transposes/reshapes."""
    def pad_to(a, shape):
        return jnp.pad(a, [(0, t - s) for s, t in zip(a.shape, shape)])

    wq = pad_to(p["wq"].T, (PDIM, PDIM))
    wk = pad_to(p["wk"].T, (PDIM, PDIM))
    wv = pad_to(p["wv"].T, (PDIM, PDIM))
    wqkv = jnp.concatenate([wq, wk, wv], axis=1).astype(jnp.bfloat16)  # (256, 768)
    bqkv = jnp.concatenate([pad_to(p["bq"], (PDIM,)),
                            pad_to(p["bk"], (PDIM,)),
                            pad_to(p["bv"], (PDIM,))]).reshape(1, 3 * PDIM)

    w1 = pad_to(p["w1"].T, (PDIM, HIDDEN)).astype(jnp.bfloat16)        # (256, 256)
    b1 = p["b1"].reshape(1, HIDDEN)

    w2 = pad_to(p["w2"].T, (8, OUT_PAD))                               # (8, 128) f32
    b2 = pad_to(p["b2"], (OUT_PAD,)).reshape(1, OUT_PAD)
    return dict(wqkv=wqkv, bqkv=bqkv, w1=w1, b1=b1, w2=w2, b2=b2)


def quantum_attention_net(x, kp):
    B = x.shape[0]
    xp = jnp.pad(x, ((0, 0), (0, PDIM - DIM))).astype(jnp.bfloat16)    # (B, 256)
    args = (xp, kp["wqkv"], kp["bqkv"], kp["w1"], kp["b1"], kp["w2"], kp["b2"])

    def full_spec(a):
        nd = a.ndim
        return pl.BlockSpec(a.shape, lambda i, _nd=nd: (0,) * _nd)

    flops = int(2 * B * PDIM * 3 * PDIM        # fused QKV projection
                + 2 * B * B * PDIM             # scores
                + 2 * B * B * PDIM             # weights @ V
                + 2 * B * PDIM * HIDDEN        # fc1
                + 10 * B * OUT_PAD)            # quantum tail + fc2 FMAs
    transcendentals = int(B * B + 5 * B)       # exp + cos + reciprocal
    bytes_accessed = int(sum(a.size * a.dtype.itemsize for a in args)
                         + B * OUT_PAD * 4)

    y = pl.pallas_call(
        qattn_kernel,
        out_shape=jax.ShapeDtypeStruct((B, OUT_PAD), jnp.float32),
        grid=(1,),
        in_specs=[full_spec(a) for a in args],
        out_specs=pl.BlockSpec((B, OUT_PAD), lambda i: (0, 0)),
        compiler_params=pltpu.CompilerParams(
            dimension_semantics=("arbitrary",)),
        cost_estimate=pl.CostEstimate(flops=flops,
                                      transcendentals=transcendentals,
                                      bytes_accessed=bytes_accessed),
    )(*args)
    return y[:, :OUT_DIM].reshape(-1, 5, 3)


def reference(x, p):
    """Pure-JAX reference mirroring the PyTorch forward with the same bf16
    weight-matmul numerics the kernel uses (f32 accumulation)."""
    def mm_bf16(a, w_t):
        return jnp.dot(a.astype(jnp.bfloat16), w_t.astype(jnp.bfloat16),
                       preferred_element_type=jnp.float32)

    q = mm_bf16(x, p["wq"].T) + p["bq"]
    k = mm_bf16(x, p["wk"].T) + p["bk"]
    v = mm_bf16(x, p["wv"].T) + p["bv"]
    s = jnp.dot(q, k.T, preferred_element_type=jnp.float32) * SCALE
    w = jax.nn.softmax(s, axis=-1)
    a = jnp.dot(w, v, preferred_element_type=jnp.float32)
    h = jax.nn.relu(mm_bf16(a, p["w1"].T) + p["b1"])
    qout = jnp.cumprod(jnp.cos(h[:, :N_QUBITS]), axis=-1)
    return (qout @ p["w2"].T + p["b2"]).reshape(-1, 5, 3)


if __name__ == "__main__":
    key = jax.random.PRNGKey(0)
    kx, kp_key = jax.random.split(key)

    B = 8
    x = jax.random.normal(kx, (B, DIM), dtype=jnp.float32)
    params = init_params(kp_key)
    kparams = prepare_params(params)   # one-time layout prep (not per call)

    run = jax.jit(quantum_attention_net)
    out = jax.block_until_ready(run(x, kparams))

    ref = jax.block_until_ready(reference(x, params))
    assert out.shape == (B, 5, 3), out.shape
    assert jnp.allclose(out, ref, atol=1e-3, rtol=1e-3), (
        float(jnp.max(jnp.abs(out - ref))))

    print("KERNEL_OK")
</pallas_src>

<mosaic_0001>
module attributes {stable_mosaic.version = 11 : i64} {
  func.func @qattn_kernel(%arg0: i32, %arg1: memref<8x256xbf16, #tpu.memory_space<vmem>>, %arg2: memref<256x768xbf16, #tpu.memory_space<vmem>>, %arg3: memref<1x768xf32, #tpu.memory_space<vmem>>, %arg4: memref<256x256xbf16, #tpu.memory_space<vmem>>, %arg5: memref<1x256xf32, #tpu.memory_space<vmem>>, %arg6: memref<8x128xf32, #tpu.memory_space<vmem>>, %arg7: memref<1x128xf32, #tpu.memory_space<vmem>>, %arg8: memref<8x128xf32, #tpu.memory_space<vmem>>) attributes {dimension_semantics = [#tpu.dimension_semantics<arbitrary>], iteration_bounds = array<i64: 1>, scalar_prefetch = 0 : i64, scratch_operands = 0 : i64, tpu.core_type = #tpu.core_type<tc>, window_params = [{pipeline_mode = #tpu.pipeline_mode<synchronous>, transform_indices = @transform_0, window_bounds = array<i64: 8, 256>}, {pipeline_mode = #tpu.pipeline_mode<synchronous>, transform_indices = @transform_1, window_bounds = array<i64: 256, 768>}, {pipeline_mode = #tpu.pipeline_mode<synchronous>, transform_indices = @transform_2, window_bounds = array<i64: 1, 768>}, {pipeline_mode = #tpu.pipeline_mode<synchronous>, transform_indices = @transform_3, window_bounds = array<i64: 256, 256>}, {pipeline_mode = #tpu.pipeline_mode<synchronous>, transform_indices = @transform_4, window_bounds = array<i64: 1, 256>}, {pipeline_mode = #tpu.pipeline_mode<synchronous>, transform_indices = @transform_5, window_bounds = array<i64: 8, 128>}, {pipeline_mode = #tpu.pipeline_mode<synchronous>, transform_indices = @transform_6, window_bounds = array<i64: 1, 128>}, {pipeline_mode = #tpu.pipeline_mode<synchronous>, transform_indices = @transform_7, window_bounds = array<i64: 8, 128>}]} {
    %c0 = arith.constant 0 : index
    %c0_0 = arith.constant 0 : index
    %0 = vector.load %arg1[%c0, %c0_0] : memref<8x256xbf16, #tpu.memory_space<vmem>>, vector<8x256xbf16>
    %c0_1 = arith.constant 0 : index
    %c0_2 = arith.constant 0 : index
    %1 = vector.load %arg2[%c0_1, %c0_2] : memref<256x768xbf16, #tpu.memory_space<vmem>>, vector<256x768xbf16>
    %cst = arith.constant dense<0.000000e+00> : vector<8x768xf32>
    %2 = tpu.matmul %0, %1, %cst {dimension_numbers = #tpu.dot_dimension_numbers<[1], [0], [0], [1], [0, 0, 1, 1], [], []>} : vector<8x256xbf16>, vector<256x768xbf16>, vector<8x768xf32> -> vector<8x768xf32>
    %c0_3 = arith.constant 0 : index
    %c0_4 = arith.constant 0 : index
    %3 = vector.load %arg3[%c0_3, %c0_4] : memref<1x768xf32, #tpu.memory_space<vmem>>, vector<1x768xf32>
    %4 = vector.broadcast %3 : vector<1x768xf32> to vector<8x768xf32>
    %5 = arith.addf %2, %4 : vector<8x768xf32>
    %6 = vector.extract_strided_slice %5 {offsets = [0, 0], sizes = [8, 256], strides = [1, 1]} : vector<8x768xf32> to vector<8x256xf32>
    %7 = vector.extract_strided_slice %5 {offsets = [0, 256], sizes = [8, 256], strides = [1, 1]} : vector<8x768xf32> to vector<8x256xf32>
    %8 = vector.extract_strided_slice %5 {offsets = [0, 512], sizes = [8, 256], strides = [1, 1]} : vector<8x768xf32> to vector<8x256xf32>
    %cst_5 = arith.constant dense<0.000000e+00> : vector<8x8xf32>
    %9 = tpu.matmul %6, %7, %cst_5 {dimension_numbers = #tpu.dot_dimension_numbers<[1], [1], [0], [0], [0, 0, 1, 0], [], []>} : vector<8x256xf32>, vector<8x256xf32>, vector<8x8xf32> -> vector<8x8xf32>
    %cst_6 = arith.constant 0.0833333358 : f32
    %10 = vector.broadcast %cst_6 : f32 to vector<8x8xf32>
    %11 = arith.mulf %9, %10 : vector<8x8xf32>
    %cst_7 = arith.constant dense<0xFF800000> : vector<8xf32>
    %12 = vector.multi_reduction <maximumf>, %11, %cst_7 [1] : vector<8x8xf32> to vector<8xf32>
    %13 = vector.shape_cast %12 : vector<8xf32> to vector<8x1xf32>
    %14 = vector.broadcast %13 : vector<8x1xf32> to vector<8x8xf32>
    %15 = arith.subf %11, %14 : vector<8x8xf32>
    %16 = math.exp %15 : vector<8x8xf32>
    %cst_8 = arith.constant dense<0.000000e+00> : vector<8xf32>
    %17 = vector.multi_reduction <add>, %16, %cst_8 [1] : vector<8x8xf32> to vector<8xf32>
    %18 = vector.shape_cast %17 : vector<8xf32> to vector<8x1xf32>
    %19 = tpu.reciprocal %18 : vector<8x1xf32> -> vector<8x1xf32>
    %20 = vector.broadcast %19 : vector<8x1xf32> to vector<8x8xf32>
    %21 = arith.mulf %16, %20 : vector<8x8xf32>
    %cst_9 = arith.constant dense<0.000000e+00> : vector<8x256xf32>
    %22 = tpu.matmul %21, %8, %cst_9 {dimension_numbers = #tpu.dot_dimension_numbers<[1], [0], [0], [1], [0, 0, 1, 1], [], []>} : vector<8x8xf32>, vector<8x256xf32>, vector<8x256xf32> -> vector<8x256xf32>
    %23 = arith.truncf %22 : vector<8x256xf32> to vector<8x256xbf16>
    %c0_10 = arith.constant 0 : index
    %c0_11 = arith.constant 0 : index
    %24 = vector.load %arg4[%c0_10, %c0_11] : memref<256x256xbf16, #tpu.memory_space<vmem>>, vector<256x256xbf16>
    %cst_12 = arith.constant dense<0.000000e+00> : vector<8x256xf32>
    %25 = tpu.matmul %23, %24, %cst_12 {dimension_numbers = #tpu.dot_dimension_numbers<[1], [0], [0], [1], [0, 0, 1, 1], [], []>} : vector<8x256xbf16>, vector<256x256xbf16>, vector<8x256xf32> -> vector<8x256xf32>
    %c0_13 = arith.constant 0 : index
    %c0_14 = arith.constant 0 : index
    %26 = vector.load %arg5[%c0_13, %c0_14] : memref<1x256xf32, #tpu.memory_space<vmem>>, vector<1x256xf32>
    %27 = vector.broadcast %26 : vector<1x256xf32> to vector<8x256xf32>
    %28 = arith.addf %25, %27 : vector<8x256xf32>
    %cst_15 = arith.constant 0.000000e+00 : f32
    %29 = vector.broadcast %cst_15 : f32 to vector<8x256xf32>
    %30 = arith.maximumf %28, %29 : vector<8x256xf32>
    %31 = vector.extract_strided_slice %30 {offsets = [0, 0], sizes = [8, 4], strides = [1, 1]} : vector<8x256xf32> to vector<8x4xf32>
    %32 = math.cos %31 : vector<8x4xf32>
    %33 = vector.extract_strided_slice %32 {offsets = [0, 0], sizes = [8, 1], strides = [1, 1]} : vector<8x4xf32> to vector<8x1xf32>
    %34 = vector.extract_strided_slice %32 {offsets = [0, 1], sizes = [8, 1], strides = [1, 1]} : vector<8x4xf32> to vector<8x1xf32>
    %35 = arith.mulf %33, %34 : vector<8x1xf32>
    %36 = vector.extract_strided_slice %32 {offsets = [0, 2], sizes = [8, 1], strides = [1, 1]} : vector<8x4xf32> to vector<8x1xf32>
    %37 = arith.mulf %35, %36 : vector<8x1xf32>
    %38 = vector.extract_strided_slice %32 {offsets = [0, 3], sizes = [8, 1], strides = [1, 1]} : vector<8x4xf32> to vector<8x1xf32>
    %39 = arith.mulf %37, %38 : vector<8x1xf32>
    %c0_16 = arith.constant 0 : index
    %c0_17 = arith.constant 0 : index
    %40 = vector.load %arg6[%c0_16, %c0_17] : memref<8x128xf32, #tpu.memory_space<vmem>>, vector<8x128xf32>
    %c0_18 = arith.constant 0 : index
    %c0_19 = arith.constant 0 : index
    %41 = vector.load %arg7[%c0_18, %c0_19] : memref<1x128xf32, #tpu.memory_space<vmem>>, vector<1x128xf32>
    %42 = vector.extract_strided_slice %40 {offsets = [0, 0], sizes = [1, 128], strides = [1, 1]} : vector<8x128xf32> to vector<1x128xf32>
    %43 = vector.broadcast %33 : vector<8x1xf32> to vector<8x128xf32>
    %44 = vector.broadcast %42 : vector<1x128xf32> to vector<8x128xf32>
    %45 = arith.mulf %43, %44 : vector<8x128xf32>
    %46 = vector.broadcast %41 : vector<1x128xf32> to vector<8x128xf32>
    %47 = arith.addf %46, %45 : vector<8x128xf32>
    %48 = vector.extract_strided_slice %40 {offsets = [1, 0], sizes = [1, 128], strides = [1, 1]} : vector<8x128xf32> to vector<1x128xf32>
    %49 = vector.broadcast %35 : vector<8x1xf32> to vector<8x128xf32>
    %50 = vector.broadcast %48 : vector<1x128xf32> to vector<8x128xf32>
    %51 = arith.mulf %49, %50 : vector<8x128xf32>
    %52 = arith.addf %47, %51 : vector<8x128xf32>
    %53 = vector.extract_strided_slice %40 {offsets = [2, 0], sizes = [1, 128], strides = [1, 1]} : vector<8x128xf32> to vector<1x128xf32>
    %54 = vector.broadcast %37 : vector<8x1xf32> to vector<8x128xf32>
    %55 = vector.broadcast %53 : vector<1x128xf32> to vector<8x128xf32>
    %56 = arith.mulf %54, %55 : vector<8x128xf32>
    %57 = arith.addf %52, %56 : vector<8x128xf32>
    %58 = vector.extract_strided_slice %40 {offsets = [3, 0], sizes = [1, 128], strides = [1, 1]} : vector<8x128xf32> to vector<1x128xf32>
    %59 = vector.broadcast %39 : vector<8x1xf32> to vector<8x128xf32>
    %60 = vector.broadcast %58 : vector<1x128xf32> to vector<8x128xf32>
    %61 = arith.mulf %59, %60 : vector<8x128xf32>
    %62 = arith.addf %57, %61 : vector<8x128xf32>
    %c0_20 = arith.constant 0 : index
    %c0_21 = arith.constant 0 : index
    %63 = vector.load %arg8[%c0_20, %c0_21] : memref<8x128xf32, #tpu.memory_space<vmem>>, vector<8x128xf32>
    tpu.vector_store %arg8[%c0_20, %c0_21], %62 {strides = array<i32>} : memref<8x128xf32, #tpu.memory_space<vmem>>, vector<8x128xf32>,
    return
  }
  func.func @transform_0(%arg0: i32) -> (i32, i32) {
    %c0_i32 = arith.constant 0 : i32
    %c0_i32_0 = arith.constant 0 : i32
    %c0_i32_1 = arith.constant 0 : i32
    return %c0_i32, %c0_i32_0 : i32, i32
  }
  func.func @transform_1(%arg0: i32) -> (i32, i32) {
    %c0_i32 = arith.constant 0 : i32
    %c0_i32_0 = arith.constant 0 : i32
    %c0_i32_1 = arith.constant 0 : i32
    return %c0_i32, %c0_i32_0 : i32, i32
  }
  func.func @transform_2(%arg0: i32) -> (i32, i32) {
    %c0_i32 = arith.constant 0 : i32
    %c0_i32_0 = arith.constant 0 : i32
    %c0_i32_1 = arith.constant 0 : i32
    return %c0_i32, %c0_i32_0 : i32, i32
  }
  func.func @transform_3(%arg0: i32) -> (i32, i32) {
    %c0_i32 = arith.constant 0 : i32
    %c0_i32_0 = arith.constant 0 : i32
    %c0_i32_1 = arith.constant 0 : i32
    return %c0_i32, %c0_i32_0 : i32, i32
  }
  func.func @transform_4(%arg0: i32) -> (i32, i32) {
    %c0_i32 = arith.constant 0 : i32
    %c0_i32_0 = arith.constant 0 : i32
    %c0_i32_1 = arith.constant 0 : i32
    return %c0_i32, %c0_i32_0 : i32, i32
  }
  func.func @transform_5(%arg0: i32) -> (i32, i32) {
    %c0_i32 = arith.constant 0 : i32
    %c0_i32_0 = arith.constant 0 : i32
    %c0_i32_1 = arith.constant 0 : i32
    return %c0_i32, %c0_i32_0 : i32, i32
  }
  func.func @transform_6(%arg0: i32) -> (i32, i32) {
    %c0_i32 = arith.constant 0 : i32
    %c0_i32_0 = arith.constant 0 : i32
    %c0_i32_1 = arith.constant 0 : i32
    return %c0_i32, %c0_i32_0 : i32, i32
  }
  func.func @transform_7(%arg0: i32) -> (i32, i32) {
    %c0_i32 = arith.constant 0 : i32
    %c0_i32_0 = arith.constant 0 : i32
    %c0_i32_1 = arith.constant 0 : i32
    return %c0_i32, %c0_i32_0 : i32, i32
  }
}

</mosaic_0001>

<llo_original>
// kernel: quantum_attention_net.1
$region0: #{quantum_attention_net.1}
  #allocation0 [shape = 'u32[]', space=smem, size = 0x4, offset = 0x4, fixed_abs, tag = 'smem constant byte address 0x4 - core index']
  #allocation1 [shape = 'u32[72,128]{1,0:T(1,128)}', space=vmem, size = 0x9000, scoped, tag = 'internal scratch']
  %s0 = inlined_call_operand.vmem [shape: bf16[8,256], index: 0, kind: input, shape index: {}]
  %s1 = inlined_call_operand.hbm [shape: bf16[256,768], index: 1, kind: input, shape index: {}]
  %s2 = inlined_call_operand.vmem [shape: f32[1,768], index: 2, kind: input, shape index: {}]
  %s3 = inlined_call_operand.hbm [shape: bf16[256,256], index: 3, kind: input, shape index: {}]
  %s4 = inlined_call_operand.vmem [shape: f32[1,256], index: 4, kind: input, shape index: {}]
  %s5 = inlined_call_operand.vmem [shape: f32[8,128], index: 5, kind: input, shape index: {}]
  %s6 = inlined_call_operand.vmem [shape: f32[1,128], index: 6, kind: input, shape index: {}]
  %s7 = inlined_call_operand.vmem [shape: f32[8,128], index: 7, kind: output, shape index: {}]
  %s8 = sld [smem:[#allocation0]]
  $region46: #{quantum_attention_net.1} parent=0
    _
  %s10 = ssub.s32 1, %s8
  %s11 = scalar_select 0, %s10, %s8
  $region1: #{quantum_attention_net.1} parent=0
    #allocation2 [shape = 'u8[393216]{0}', space=vmem, size = 0x60000, scoped, tag = 'input window, operand 1, single buffered']
    #allocation3 [shape = 's32[1]{0}', space=sflag, size = 0x4, scoped, tag = 'scoped memory for quantum_attention_net.1']
    #allocation4 [shape = 'u8[131072]{0}', space=vmem, size = 0x20000, scoped, tag = 'input window, operand 3, single buffered']
    #allocation5 [shape = 's32[1]{0}', space=sflag, size = 0x4, scoped, tag = 'scoped memory for quantum_attention_net.1']
    %12 = vsyncpa [#allocation3], 0
    %13 = vsyncpa [#allocation5], 0
    // Predicated region
    $region2: #{quantum_attention_net.1} parent=1 // pred_check
      _
    $region3: #{quantum_attention_net.1} parent=1 // pred_check_branch
      %15 = sbr.rel (0) target = $region5
    $region4: #{quantum_attention_net.1} parent=1 // pred_region
      _
    $region5: #{quantum_attention_net.1} parent=1 // pred_fallthru
      _
    // Predicated region
    $region6: #{quantum_attention_net.1} parent=1 // pred_check
      _
    $region7: #{quantum_attention_net.1} parent=1 // pred_check_branch
      %17 = sbr.rel (0) target = $region9
    $region8: #{quantum_attention_net.1} parent=1 // pred_region
      %19 = vsyncadd [#allocation3], 0
      %s20 = sshll.u32 %s1, 4
      %s21 = int_to_ptr.hbm [resolvable:$true] %s20
      %s22 = sshll.u32 [#allocation2], 4
      %s23 = int_to_ptr.vmem [resolvable:$true] %s22
      %28 = dma.hbm_to_vmem [thread:$0]  %s21, 12288, %s23, [#allocation3], 384, 384, 24
    $region9: #{quantum_attention_net.1} parent=1 // pred_fallthru
      _
    // Predicated region
    $region10: #{quantum_attention_net.1} parent=1 // pred_check
      _
    $region11: #{quantum_attention_net.1} parent=1 // pred_check_branch
      %30 = sbr.rel (0) target = $region13
    $region12: #{quantum_attention_net.1} parent=1 // pred_region
      _
    $region13: #{quantum_attention_net.1} parent=1 // pred_fallthru
      _
    // Predicated region
    $region14: #{quantum_attention_net.1} parent=1 // pred_check
      _
    $region15: #{quantum_attention_net.1} parent=1 // pred_check_branch
      %32 = sbr.rel (0) target = $region17
    $region16: #{quantum_attention_net.1} parent=1 // pred_region
      %34 = vsyncadd [#allocation5], 0
      %s35 = sshll.u32 %s3, 4
      %s36 = int_to_ptr.hbm [resolvable:$true] %s35
      %s37 = sshll.u32 [#allocation4], 4
      %s38 = int_to_ptr.vmem [resolvable:$true] %s37
      %43 = dma.hbm_to_vmem [thread:$0]  %s36, 4096, %s38, [#allocation5], 128, 128, 8
    $region17: #{quantum_attention_net.1} parent=1 // pred_fallthru
      _
    // Predicated region
    $region18: #{quantum_attention_net.1} parent=1 // pred_check
      _
    $region19: #{quantum_attention_net.1} parent=1 // pred_check_branch
      %45 = sbr.rel (0) target = $region21
    $region20: #{quantum_attention_net.1} parent=1 // pred_region
      _
    $region21: #{quantum_attention_net.1} parent=1 // pred_fallthru
      _
    // Predicated region
    $region22: #{quantum_attention_net.1} parent=1 // pred_check
      _
    $region23: #{quantum_attention_net.1} parent=1 // pred_check_branch
      %47 = sbr.rel (0) target = $region25
    $region24: #{quantum_attention_net.1} parent=1 // pred_region
      _
    $region25: #{quantum_attention_net.1} parent=1 // pred_fallthru
      _
    // Predicated region
    $region26: #{quantum_attention_net.1} parent=1 // pred_check
      _
    $region27: #{quantum_attention_net.1} parent=1 // pred_check_branch
      %49 = sbr.rel (0) target = $region29
    $region28: #{quantum_attention_net.1} parent=1 // pred_region
      _
    $region29: #{quantum_attention_net.1} parent=1 // pred_fallthru
      _
    // Predicated region
    $region30: #{quantum_attention_net.1} parent=1 // pred_check
      _
    $region31: #{quantum_attention_net.1} parent=1 // pred_check_branch
      %51 = sbr.rel (0) target = $region33
    $region32: #{quantum_attention_net.1} parent=1 // pred_region
      %53 = dma.done [#allocation3], 12288
    $region33: #{quantum_attention_net.1} parent=1 // pred_fallthru
      _
    // Predicated region
    $region34: #{quantum_attention_net.1} parent=1 // pred_check
      _
    $region35: #{quantum_attention_net.1} parent=1 // pred_check_branch
      %55 = sbr.rel (0) target = $region37
    $region36: #{quantum_attention_net.1} parent=1 // pred_region
      %57 = dma.done [#allocation5], 4096
    $region37: #{quantum_attention_net.1} parent=1 // pred_fallthru
      _
    %v58 = vld [vmem:[%s0] sm:$0xff]
    %v59 = vld [vmem:[#allocation2] sm:$0xff]
    %v60 = vld [vmem:[#allocation2 + $0x8] sm:$0xff]
    %v61 = vld [vmem:[#allocation2 + $0x10] sm:$0xff]
    %v62 = vld [vmem:[#allocation2 + $0x18] sm:$0xff]
    %v63 = vld [vmem:[#allocation2 + $0x20] sm:$0xff]
    %v64 = vld [vmem:[#allocation2 + $0x28] sm:$0xff]
    %v65 = vld [vmem:[#allocation2 + $0x30] sm:$0xff]
    %v66 = vld [vmem:[#allocation2 + $0x38] sm:$0xff]
    %v67 = vld [vmem:[#allocation2 + $0x40] sm:$0xff]
    %v68 = vld [vmem:[#allocation2 + $0x48] sm:$0xff]
    %v69 = vld [vmem:[#allocation2 + $0x50] sm:$0xff]
    %v70 = vld [vmem:[#allocation2 + $0x58] sm:$0xff]
    %v71 = vld [vmem:[#allocation2 + $0x60] sm:$0xff]
    %v72 = vld [vmem:[#allocation2 + $0x68] sm:$0xff]
    %v73 = vld [vmem:[#allocation2 + $0x70] sm:$0xff]
    %v74 = vld [vmem:[#allocation2 + $0x78] sm:$0xff]
    %v75 = vld [vmem:[#allocation2 + $0x80] sm:$0xff]
    %v76 = vld [vmem:[#allocation2 + $0x88] sm:$0xff]
    %v77 = vld [vmem:[#allocation2 + $0x90] sm:$0xff]
    %v78 = vld [vmem:[#allocation2 + $0x98] sm:$0xff]
    %v79 = vld [vmem:[#allocation2 + $0xa0] sm:$0xff]
    %v80 = vld [vmem:[#allocation2 + $0xa8] sm:$0xff]
    %v81 = vld [vmem:[#allocation2 + $0xb0] sm:$0xff]
    %v82 = vld [vmem:[#allocation2 + $0xb8] sm:$0xff]
    %v83 = vld [vmem:[#allocation2 + $0xc0] sm:$0xff]
    %v84 = vld [vmem:[#allocation2 + $0xc8] sm:$0xff]
    %v85 = vld [vmem:[#allocation2 + $0xd0] sm:$0xff]
    %v86 = vld [vmem:[#allocation2 + $0xd8] sm:$0xff]
    %v87 = vld [vmem:[#allocation2 + $0xe0] sm:$0xff]
    %v88 = vld [vmem:[#allocation2 + $0xe8] sm:$0xff]
    %v89 = vld [vmem:[#allocation2 + $0xf0] sm:$0xff]
    %v90 = vld [vmem:[#allocation2 + $0xf8] sm:$0xff]
    %v91 = vld [vmem:[#allocation2 + $0x100] sm:$0xff]
    %v92 = vld [vmem:[#allocation2 + $0x108] sm:$0xff]
    %v93 = vld [vmem:[#allocation2 + $0x110] sm:$0xff]
    %v94 = vld [vmem:[#allocation2 + $0x118] sm:$0xff]
    %v95 = vld [vmem:[#allocation2 + $0x120] sm:$0xff]
    %v96 = vld [vmem:[#allocation2 + $0x128] sm:$0xff]
    %v97 = vld [vmem:[#allocation2 + $0x130] sm:$0xff]
    %v98 = vld [vmem:[#allocation2 + $0x138] sm:$0xff]
    %v99 = vld [vmem:[#allocation2 + $0x140] sm:$0xff]
    %v100 = vld [vmem:[#allocation2 + $0x148] sm:$0xff]
    %v101 = vld [vmem:[#allocation2 + $0x150] sm:$0xff]
    %v102 = vld [vmem:[#allocation2 + $0x158] sm:$0xff]
    %v103 = vld [vmem:[#allocation2 + $0x160] sm:$0xff]
    %v104 = vld [vmem:[#allocation2 + $0x168] sm:$0xff]
    %v105 = vld [vmem:[#allocation2 + $0x170] sm:$0xff]
    %v106 = vld [vmem:[#allocation2 + $0x178] sm:$0xff]
    %v107 = vld [vmem:[#allocation2 + $0x180] sm:$0xff]
    %v108 = vld [vmem:[#allocation2 + $0x188] sm:$0xff]
    %v109 = vld [vmem:[#allocation2 + $0x190] sm:$0xff]
    %v110 = vld [vmem:[#allocation2 + $0x198] sm:$0xff]
    %v111 = vld [vmem:[#allocation2 + $0x1a0] sm:$0xff]
    %v112 = vld [vmem:[#allocation2 + $0x1a8] sm:$0xff]
    %v113 = vld [vmem:[#allocation2 + $0x1b0] sm:$0xff]
    %v114 = vld [vmem:[#allocation2 + $0x1b8] sm:$0xff]
    %v115 = vld [vmem:[#allocation2 + $0x1c0] sm:$0xff]
    %v116 = vld [vmem:[#allocation2 + $0x1c8] sm:$0xff]
    %v117 = vld [vmem:[#allocation2 + $0x1d0] sm:$0xff]
    %v118 = vld [vmem:[#allocation2 + $0x1d8] sm:$0xff]
    %v119 = vld [vmem:[#allocation2 + $0x1e0] sm:$0xff]
    %v120 = vld [vmem:[#allocation2 + $0x1e8] sm:$0xff]
    %v121 = vld [vmem:[#allocation2 + $0x1f0] sm:$0xff]
    %v122 = vld [vmem:[#allocation2 + $0x1f8] sm:$0xff]
    %v123 = vld [vmem:[#allocation2 + $0x200] sm:$0xff]
    %v124 = vld [vmem:[#allocation2 + $0x208] sm:$0xff]
    %v125 = vld [vmem:[#allocation2 + $0x210] sm:$0xff]
    %v126 = vld [vmem:[#allocation2 + $0x218] sm:$0xff]
    %v127 = vld [vmem:[#allocation2 + $0x220] sm:$0xff]
    %v128 = vld [vmem:[#allocation2 + $0x228] sm:$0xff]
    %v129 = vld [vmem:[#allocation2 + $0x230] sm:$0xff]
    %v130 = vld [vmem:[#allocation2 + $0x238] sm:$0xff]
    %v131 = vld [vmem:[#allocation2 + $0x240] sm:$0xff]
    %v132 = vld [vmem:[#allocation2 + $0x248] sm:$0xff]
    %v133 = vld [vmem:[#allocation2 + $0x250] sm:$0xff]
    %v134 = vld [vmem:[#allocation2 + $0x258] sm:$0xff]
    %v135 = vld [vmem:[#allocation2 + $0x260] sm:$0xff]
    %v136 = vld [vmem:[#allocation2 + $0x268] sm:$0xff]
    %v137 = vld [vmem:[#allocation2 + $0x270] sm:$0xff]
    %v138 = vld [vmem:[#allocation2 + $0x278] sm:$0xff]
    %v139 = vld [vmem:[#allocation2 + $0x280] sm:$0xff]
    %v140 = vld [vmem:[#allocation2 + $0x288] sm:$0xff]
    %v141 = vld [vmem:[#allocation2 + $0x290] sm:$0xff]
    %v142 = vld [vmem:[#allocation2 + $0x298] sm:$0xff]
    %v143 = vld [vmem:[#allocation2 + $0x2a0] sm:$0xff]
    %v144 = vld [vmem:[#allocation2 + $0x2a8] sm:$0xff]
    %v145 = vld [vmem:[#allocation2 + $0x2b0] sm:$0xff]
    %v146 = vld [vmem:[#allocation2 + $0x2b8] sm:$0xff]
    %v147 = vld [vmem:[#allocation2 + $0x2c0] sm:$0xff]
    %v148 = vld [vmem:[#allocation2 + $0x2c8] sm:$0xff]
    %v149 = vld [vmem:[#allocation2 + $0x2d0] sm:$0xff]
    %v150 = vld [vmem:[#allocation2 + $0x2d8] sm:$0xff]
    %v151 = vld [vmem:[#allocation2 + $0x2e0] sm:$0xff]
    %v152 = vld [vmem:[#allocation2 + $0x2e8] sm:$0xff]
    %v153 = vld [vmem:[#allocation2 + $0x2f0] sm:$0xff]
    %v154 = vld [vmem:[#allocation2 + $0x2f8] sm:$0xff]
    %v155 = vld [vmem:[%s2] sm:$0x3f]
    %v157 = vperm.slane %v155, 0
    %v158 = vperm.slane %v155, 1
    %v159 = vperm.slane %v155, 2
    %v160 = vperm.slane %v155, 3
    %v161 = vperm.slane %v155, 4
    %v162 = vperm.slane %v155, 5
    %v170 = vunpack.c.l.b16 %v58
    %v171 = vunpack.c.h.b16 %v58
    %v172 = vpack.c.b16 %v170, %v170
    %v173 = vpack.c.b16 %v171, %v171
    %v272 = vunpack.c.l.b16 %v59
    %v273 = vunpack.c.h.b16 %v59
    %v274 = vunpack.c.l.b16 %v60
    %v275 = vunpack.c.h.b16 %v60
    %v276 = vunpack.c.l.b16 %v61
    %v277 = vunpack.c.h.b16 %v61
    %v278 = vunpack.c.l.b16 %v62
    %v279 = vunpack.c.h.b16 %v62
    %v280 = vunpack.c.l.b16 %v63
    %v281 = vunpack.c.h.b16 %v63
    %v282 = vunpack.c.l.b16 %v64
    %v283 = vunpack.c.h.b16 %v64
    %v284 = vunpack.c.l.b16 %v65
    %v285 = vunpack.c.h.b16 %v65
    %v286 = vunpack.c.l.b16 %v66
    %v287 = vunpack.c.h.b16 %v66
    %v288 = vunpack.c.l.b16 %v67
    %v289 = vunpack.c.h.b16 %v67
    %v290 = vunpack.c.l.b16 %v68
    %v291 = vunpack.c.h.b16 %v68
    %v292 = vunpack.c.l.b16 %v69
    %v293 = vunpack.c.h.b16 %v69
    %v294 = vunpack.c.l.b16 %v70
    %v295 = vunpack.c.h.b16 %v70
    %v296 = vunpack.c.l.b16 %v71
    %v297 = vunpack.c.h.b16 %v71
    %v298 = vunpack.c.l.b16 %v72
    %v299 = vunpack.c.h.b16 %v72
    %v300 = vunpack.c.l.b16 %v73
    %v301 = vunpack.c.h.b16 %v73
    %v302 = vunpack.c.l.b16 %v74
    %v303 = vunpack.c.h.b16 %v74
    %v304 = vunpack.c.l.b16 %v75
    %v305 = vunpack.c.h.b16 %v75
    %v306 = vunpack.c.l.b16 %v76
    %v307 = vunpack.c.h.b16 %v76
    %v308 = vunpack.c.l.b16 %v77
    %v309 = vunpack.c.h.b16 %v77
    %v310 = vunpack.c.l.b16 %v78
    %v311 = vunpack.c.h.b16 %v78
    %v312 = vunpack.c.l.b16 %v79
    %v313 = vunpack.c.h.b16 %v79
    %v314 = vunpack.c.l.b16 %v80
    %v315 = vunpack.c.h.b16 %v80
    %v316 = vunpack.c.l.b16 %v81
    %v317 = vunpack.c.h.b16 %v81
    %v318 = vunpack.c.l.b16 %v82
    %v319 = vunpack.c.h.b16 %v82
    %v320 = vunpack.c.l.b16 %v83
    %v321 = vunpack.c.h.b16 %v83
    %v322 = vunpack.c.l.b16 %v84
    %v323 = vunpack.c.h.b16 %v84
    %v324 = vunpack.c.l.b16 %v85
    %v325 = vunpack.c.h.b16 %v85
    %v326 = vunpack.c.l.b16 %v86
    %v327 = vunpack.c.h.b16 %v86
    %v328 = vunpack.c.l.b16 %v87
    %v329 = vunpack.c.h.b16 %v87
    %v330 = vunpack.c.l.b16 %v88
    %v331 = vunpack.c.h.b16 %v88
    %v332 = vunpack.c.l.b16 %v89
    %v333 = vunpack.c.h.b16 %v89
    %v334 = vunpack.c.l.b16 %v90
    %v335 = vunpack.c.h.b16 %v90
    %v336 = vunpack.c.l.b16 %v91
    %v337 = vunpack.c.h.b16 %v91
    %v338 = vunpack.c.l.b16 %v92
    %v339 = vunpack.c.h.b16 %v92
    %v340 = vunpack.c.l.b16 %v93
    %v341 = vunpack.c.h.b16 %v93
    %v342 = vunpack.c.l.b16 %v94
    %v343 = vunpack.c.h.b16 %v94
    %v344 = vunpack.c.l.b16 %v95
    %v345 = vunpack.c.h.b16 %v95
    %v346 = vunpack.c.l.b16 %v96
    %v347 = vunpack.c.h.b16 %v96
    %v348 = vunpack.c.l.b16 %v97
    %v349 = vunpack.c.h.b16 %v97
    %v350 = vunpack.c.l.b16 %v98
    %v351 = vunpack.c.h.b16 %v98
    %v352 = vunpack.c.l.b16 %v99
    %v353 = vunpack.c.h.b16 %v99
    %v354 = vunpack.c.l.b16 %v100
    %v355 = vunpack.c.h.b16 %v100
    %v356 = vunpack.c.l.b16 %v101
    %v357 = vunpack.c.h.b16 %v101
    %v358 = vunpack.c.l.b16 %v102
    %v359 = vunpack.c.h.b16 %v102
    %v360 = vunpack.c.l.b16 %v103
    %v361 = vunpack.c.h.b16 %v103
    %v362 = vunpack.c.l.b16 %v104
    %v363 = vunpack.c.h.b16 %v104
    %v364 = vunpack.c.l.b16 %v105
    %v365 = vunpack.c.h.b16 %v105
    %v366 = vunpack.c.l.b16 %v106
    %v367 = vunpack.c.h.b16 %v106
    %v368 = vunpack.c.l.b16 %v107
    %v369 = vunpack.c.h.b16 %v107
    %v370 = vunpack.c.l.b16 %v108
    %v371 = vunpack.c.h.b16 %v108
    %v372 = vunpack.c.l.b16 %v109
    %v373 = vunpack.c.h.b16 %v109
    %v374 = vunpack.c.l.b16 %v110
    %v375 = vunpack.c.h.b16 %v110
    %v376 = vunpack.c.l.b16 %v111
    %v377 = vunpack.c.h.b16 %v111
    %v378 = vunpack.c.l.b16 %v112
    %v379 = vunpack.c.h.b16 %v112
    %v380 = vunpack.c.l.b16 %v113
    %v381 = vunpack.c.h.b16 %v113
    %v382 = vunpack.c.l.b16 %v114
    %v383 = vunpack.c.h.b16 %v114
    %v384 = vunpack.c.l.b16 %v115
    %v385 = vunpack.c.h.b16 %v115
    %v386 = vunpack.c.l.b16 %v116
    %v387 = vunpack.c.h.b16 %v116
    %v388 = vunpack.c.l.b16 %v117
    %v389 = vunpack.c.h.b16 %v117
    %v390 = vunpack.c.l.b16 %v118
    %v391 = vunpack.c.h.b16 %v118
    %v392 = vunpack.c.l.b16 %v119
    %v393 = vunpack.c.h.b16 %v119
    %v394 = vunpack.c.l.b16 %v120
    %v395 = vunpack.c.h.b16 %v120
    %v396 = vunpack.c.l.b16 %v121
    %v397 = vunpack.c.h.b16 %v121
    %v398 = vunpack.c.l.b16 %v122
    %v399 = vunpack.c.h.b16 %v122
    %v400 = vunpack.c.l.b16 %v123
    %v401 = vunpack.c.h.b16 %v123
    %v402 = vunpack.c.l.b16 %v124
    %v403 = vunpack.c.h.b16 %v124
    %v404 = vunpack.c.l.b16 %v125
    %v405 = vunpack.c.h.b16 %v125
    %v406 = vunpack.c.l.b16 %v126
    %v407 = vunpack.c.h.b16 %v126
    %v408 = vunpack.c.l.b16 %v127
    %v409 = vunpack.c.h.b16 %v127
    %v410 = vunpack.c.l.b16 %v128
    %v411 = vunpack.c.h.b16 %v128
    %v412 = vunpack.c.l.b16 %v129
    %v413 = vunpack.c.h.b16 %v129
    %v414 = vunpack.c.l.b16 %v130
    %v415 = vunpack.c.h.b16 %v130
    %v416 = vunpack.c.l.b16 %v131
    %v417 = vunpack.c.h.b16 %v131
    %v418 = vunpack.c.l.b16 %v132
    %v419 = vunpack.c.h.b16 %v132
    %v420 = vunpack.c.l.b16 %v133
    %v421 = vunpack.c.h.b16 %v133
    %v422 = vunpack.c.l.b16 %v134
    %v423 = vunpack.c.h.b16 %v134
    %v424 = vunpack.c.l.b16 %v135
    %v425 = vunpack.c.h.b16 %v135
    %v426 = vunpack.c.l.b16 %v136
    %v427 = vunpack.c.h.b16 %v136
    %v428 = vunpack.c.l.b16 %v137
    %v429 = vunpack.c.h.b16 %v137
    %v430 = vunpack.c.l.b16 %v138
    %v431 = vunpack.c.h.b16 %v138
    %v432 = vunpack.c.l.b16 %v139
    %v433 = vunpack.c.h.b16 %v139
    %v434 = vunpack.c.l.b16 %v140
    %v435 = vunpack.c.h.b16 %v140
    %v436 = vunpack.c.l.b16 %v141
    %v437 = vunpack.c.h.b16 %v141
    %v438 = vunpack.c.l.b16 %v142
    %v439 = vunpack.c.h.b16 %v142
    %v440 = vunpack.c.l.b16 %v143
    %v441 = vunpack.c.h.b16 %v143
    %v442 = vunpack.c.l.b16 %v144
    %v443 = vunpack.c.h.b16 %v144
    %v444 = vunpack.c.l.b16 %v145
    %v445 = vunpack.c.h.b16 %v145
    %v446 = vunpack.c.l.b16 %v146
    %v447 = vunpack.c.h.b16 %v146
    %v448 = vunpack.c.l.b16 %v147
    %v449 = vunpack.c.h.b16 %v147
    %v450 = vunpack.c.l.b16 %v148
    %v451 = vunpack.c.h.b16 %v148
    %v452 = vunpack.c.l.b16 %v149
    %v453 = vunpack.c.h.b16 %v149
    %v454 = vunpack.c.l.b16 %v150
    %v455 = vunpack.c.h.b16 %v150
    %v456 = vunpack.c.l.b16 %v151
    %v457 = vunpack.c.h.b16 %v151
    %v458 = vunpack.c.l.b16 %v152
    %v459 = vunpack.c.h.b16 %v152
    %v460 = vunpack.c.l.b16 %v153
    %v461 = vunpack.c.h.b16 %v153
    %v462 = vunpack.c.l.b16 %v154
    %v463 = vunpack.c.h.b16 %v154
    %v464 = vpack.c.b16 %v278, %v272
    %v465 = vpack.c.b16 %v279, %v273
    %v466 = vpack.c.b16 %v280, %v274
    %v467 = vpack.c.b16 %v281, %v275
    %v468 = vpack.c.b16 %v282, %v276
    %v469 = vpack.c.b16 %v283, %v277
    %v470 = vpack.c.b16 %v290, %v284
    %v471 = vpack.c.b16 %v291, %v285
    %v472 = vpack.c.b16 %v292, %v286
    %v473 = vpack.c.b16 %v293, %v287
    %v474 = vpack.c.b16 %v294, %v288
    %v475 = vpack.c.b16 %v295, %v289
    %v476 = vpack.c.b16 %v302, %v296
    %v477 = vpack.c.b16 %v303, %v297
    %v478 = vpack.c.b16 %v304, %v298
    %v479 = vpack.c.b16 %v305, %v299
    %v480 = vpack.c.b16 %v306, %v300
    %v481 = vpack.c.b16 %v307, %v301
    %v482 = vpack.c.b16 %v314, %v308
    %v483 = vpack.c.b16 %v315, %v309
    %v484 = vpack.c.b16 %v316, %v310
    %v485 = vpack.c.b16 %v317, %v311
    %v486 = vpack.c.b16 %v318, %v312
    %v487 = vpack.c.b16 %v319, %v313
    %v488 = vpack.c.b16 %v326, %v320
    %v489 = vpack.c.b16 %v327, %v321
    %v490 = vpack.c.b16 %v328, %v322
    %v491 = vpack.c.b16 %v329, %v323
    %v492 = vpack.c.b16 %v330, %v324
    %v493 = vpack.c.b16 %v331, %v325
    %v494 = vpack.c.b16 %v338, %v332
    %v495 = vpack.c.b16 %v339, %v333
    %v496 = vpack.c.b16 %v340, %v334
    %v497 = vpack.c.b16 %v341, %v335
    %v498 = vpack.c.b16 %v342, %v336
    %v499 = vpack.c.b16 %v343, %v337
    %v500 = vpack.c.b16 %v350, %v344
    %v501 = vpack.c.b16 %v351, %v345
    %v502 = vpack.c.b16 %v352, %v346
    %v503 = vpack.c.b16 %v353, %v347
    %v504 = vpack.c.b16 %v354, %v348
    %v505 = vpack.c.b16 %v355, %v349
    %v506 = vpack.c.b16 %v362, %v356
    %v507 = vpack.c.b16 %v363, %v357
    %v508 = vpack.c.b16 %v364, %v358
    %v509 = vpack.c.b16 %v365, %v359
    %v510 = vpack.c.b16 %v366, %v360
    %v511 = vpack.c.b16 %v367, %v361
    %v512 = vpack.c.b16 %v374, %v368
    %v513 = vpack.c.b16 %v375, %v369
    %v514 = vpack.c.b16 %v376, %v370
    %v515 = vpack.c.b16 %v377, %v371
    %v516 = vpack.c.b16 %v378, %v372
    %v517 = vpack.c.b16 %v379, %v373
    %v518 = vpack.c.b16 %v386, %v380
    %v519 = vpack.c.b16 %v387, %v381
    %v520 = vpack.c.b16 %v388, %v382
    %v521 = vpack.c.b16 %v389, %v383
    %v522 = vpack.c.b16 %v390, %v384
    %v523 = vpack.c.b16 %v391, %v385
    %v524 = vpack.c.b16 %v398, %v392
    %v525 = vpack.c.b16 %v399, %v393
    %v526 = vpack.c.b16 %v400, %v394
    %v527 = vpack.c.b16 %v401, %v395
    %v528 = vpack.c.b16 %v402, %v396
    %v529 = vpack.c.b16 %v403, %v397
    %v530 = vpack.c.b16 %v410, %v404
    %v531 = vpack.c.b16 %v411, %v405
    %v532 = vpack.c.b16 %v412, %v406
    %v533 = vpack.c.b16 %v413, %v407
    %v534 = vpack.c.b16 %v414, %v408
    %v535 = vpack.c.b16 %v415, %v409
    %v536 = vpack.c.b16 %v422, %v416
    %v537 = vpack.c.b16 %v423, %v417
    %v538 = vpack.c.b16 %v424, %v418
    %v539 = vpack.c.b16 %v425, %v419
    %v540 = vpack.c.b16 %v426, %v420
    %v541 = vpack.c.b16 %v427, %v421
    %v542 = vpack.c.b16 %v434, %v428
    %v543 = vpack.c.b16 %v435, %v429
    %v544 = vpack.c.b16 %v436, %v430
    %v545 = vpack.c.b16 %v437, %v431
    %v546 = vpack.c.b16 %v438, %v432
    %v547 = vpack.c.b16 %v439, %v433
    %v548 = vpack.c.b16 %v446, %v440
    %v549 = vpack.c.b16 %v447, %v441
    %v550 = vpack.c.b16 %v448, %v442
    %v551 = vpack.c.b16 %v449, %v443
    %v552 = vpack.c.b16 %v450, %v444
    %v553 = vpack.c.b16 %v451, %v445
    %v554 = vpack.c.b16 %v458, %v452
    %v555 = vpack.c.b16 %v459, %v453
    %v556 = vpack.c.b16 %v460, %v454
    %v557 = vpack.c.b16 %v461, %v455
    %v558 = vpack.c.b16 %v462, %v456
    %v559 = vpack.c.b16 %v463, %v457
    %656 = vmatpush.bf16.msra.mxu0 %v506
    %657 = vmatpush.bf16.msra.mxu0 %v500
    %658 = vmatpush.bf16.msra.mxu0 %v494
    %659 = vmatpush.bf16.msra.mxu0 %v488
    %660 = vmatpush.bf16.msra.mxu0 %v482
    %661 = vmatpush.bf16.msra.mxu0 %v476
    %662 = vmatpush.bf16.msra.mxu0 %v470
    %663 = vmatpush.bf16.msra.mxu0 %v464
    %664 = vmatmul.bf16.gmra.mxu0 %v172
    %v665 = vpop.f32.mrf.mxu0
    %v666 = vadd.f32 %v157, %v665
    %v667 = vpop.f32.mrf.mxu0
    %668 = vdwg.mxu0
    %669 = vmatpush.bf16.msra.mxu0 %v554
    %670 = vmatpush.bf16.msra.mxu0 %v548
    %671 = vmatpush.bf16.msra.mxu0 %v542
    %672 = vmatpush.bf16.msra.mxu0 %v536
    %673 = vmatpush.bf16.msra.mxu0 %v530
    %674 = vmatpush.bf16.msra.mxu0 %v524
    %675 = vmatpush.bf16.msra.mxu0 %v518
    %676 = vmatpush.bf16.msra.mxu0 %v512
    %677 = vmatmul.bf16.gmra.mxu0 %v173
    %v678 = vpop.f32.mrf.mxu0
    %v679 = vadd.f32 %v666, %v678
    %v680 = vpop.f32.mrf.mxu0
    %681 = vdwg.mxu0
    %682 = vmatpush.bf16.msra.mxu0 %v507
    %683 = vmatpush.bf16.msra.mxu0 %v501
    %684 = vmatpush.bf16.msra.mxu0 %v495
    %685 = vmatpush.bf16.msra.mxu0 %v489
    %686 = vmatpush.bf16.msra.mxu0 %v483
    %687 = vmatpush.bf16.msra.mxu0 %v477
    %688 = vmatpush.bf16.msra.mxu0 %v471
    %689 = vmatpush.bf16.msra.mxu0 %v465
    %690 = vmatmul.bf16.gmra.mxu0 %v172
    %v691 = vpop.f32.mrf.mxu0
    %v692 = vadd.f32 %v158, %v691
    %v693 = vpop.f32.mrf.mxu0
    %694 = vdwg.mxu0
    %695 = vmatpush.bf16.msra.mxu0 %v555
    %696 = vmatpush.bf16.msra.mxu0 %v549
    %697 = vmatpush.bf16.msra.mxu0 %v543
    %698 = vmatpush.bf16.msra.mxu0 %v537
    %699 = vmatpush.bf16.msra.mxu0 %v531
    %700 = vmatpush.bf16.msra.mxu0 %v525
    %701 = vmatpush.bf16.msra.mxu0 %v519
    %702 = vmatpush.bf16.msra.mxu0 %v513
    %703 = vmatmul.bf16.gmra.mxu0 %v173
    %v704 = vpop.f32.mrf.mxu0
    %v705 = vadd.f32 %v692, %v704
    %v706 = vpop.f32.mrf.mxu0
    %707 = vdwg.mxu0
    %708 = vmatpush.bf16.msra.mxu0 %v508
    %709 = vmatpush.bf16.msra.mxu0 %v502
    %710 = vmatpush.bf16.msra.mxu0 %v496
    %711 = vmatpush.bf16.msra.mxu0 %v490
    %712 = vmatpush.bf16.msra.mxu0 %v484
    %713 = vmatpush.bf16.msra.mxu0 %v478
    %714 = vmatpush.bf16.msra.mxu0 %v472
    %715 = vmatpush.bf16.msra.mxu0 %v466
    %716 = vmatmul.bf16.gmra.mxu0 %v172
    %v717 = vpop.f32.mrf.mxu0
    %v718 = vadd.f32 %v159, %v717
    %v719 = vpop.f32.mrf.mxu0
    %720 = vdwg.mxu0
    %721 = vmatpush.bf16.msra.mxu0 %v556
    %722 = vmatpush.bf16.msra.mxu0 %v550
    %723 = vmatpush.bf16.msra.mxu0 %v544
    %724 = vmatpush.bf16.msra.mxu0 %v538
    %725 = vmatpush.bf16.msra.mxu0 %v532
    %726 = vmatpush.bf16.msra.mxu0 %v526
    %727 = vmatpush.bf16.msra.mxu0 %v520
    %728 = vmatpush.bf16.msra.mxu0 %v514
    %729 = vmatmul.bf16.gmra.mxu0 %v173
    %v730 = vpop.f32.mrf.mxu0
    %v731 = vadd.f32 %v718, %v730
    %v732 = vpop.f32.mrf.mxu0
    %733 = vdwg.mxu0
    %734 = vmatpush.bf16.msra.mxu0 %v509
    %735 = vmatpush.bf16.msra.mxu0 %v503
    %736 = vmatpush.bf16.msra.mxu0 %v497
    %737 = vmatpush.bf16.msra.mxu0 %v491
    %738 = vmatpush.bf16.msra.mxu0 %v485
    %739 = vmatpush.bf16.msra.mxu0 %v479
    %740 = vmatpush.bf16.msra.mxu0 %v473
    %741 = vmatpush.bf16.msra.mxu0 %v467
    %742 = vmatmul.bf16.gmra.mxu0 %v172
    %v743 = vpop.f32.mrf.mxu0
    %v744 = vadd.f32 %v160, %v743
    %v745 = vpop.f32.mrf.mxu0
    %746 = vdwg.mxu0
    %747 = vmatpush.bf16.msra.mxu0 %v557
    %748 = vmatpush.bf16.msra.mxu0 %v551
    %749 = vmatpush.bf16.msra.mxu0 %v545
    %750 = vmatpush.bf16.msra.mxu0 %v539
    %751 = vmatpush.bf16.msra.mxu0 %v533
    %752 = vmatpush.bf16.msra.mxu0 %v527
    %753 = vmatpush.bf16.msra.mxu0 %v521
    %754 = vmatpush.bf16.msra.mxu0 %v515
    %755 = vmatmul.bf16.gmra.mxu0 %v173
    %v756 = vpop.f32.mrf.mxu0
    %v757 = vadd.f32 %v744, %v756
    %v758 = vpop.f32.mrf.mxu0
    %759 = vdwg.mxu0
    %760 = vmatpush.bf16.msra.mxu0 %v510
    %761 = vmatpush.bf16.msra.mxu0 %v504
    %762 = vmatpush.bf16.msra.mxu0 %v498
    %763 = vmatpush.bf16.msra.mxu0 %v492
    %764 = vmatpush.bf16.msra.mxu0 %v486
    %765 = vmatpush.bf16.msra.mxu0 %v480
    %766 = vmatpush.bf16.msra.mxu0 %v474
    %767 = vmatpush.bf16.msra.mxu0 %v468
    %768 = vmatmul.bf16.gmra.mxu0 %v172
    %v769 = vpop.f32.mrf.mxu0
    %v770 = vadd.f32 %v161, %v769
    %v771 = vpop.f32.mrf.mxu0
    %772 = vdwg.mxu0
    %773 = vmatpush.bf16.msra.mxu0 %v558
    %774 = vmatpush.bf16.msra.mxu0 %v552
    %775 = vmatpush.bf16.msra.mxu0 %v546
    %776 = vmatpush.bf16.msra.mxu0 %v540
    %777 = vmatpush.bf16.msra.mxu0 %v534
    %778 = vmatpush.bf16.msra.mxu0 %v528
    %779 = vmatpush.bf16.msra.mxu0 %v522
    %780 = vmatpush.bf16.msra.mxu0 %v516
    %781 = vmatmul.bf16.gmra.mxu0 %v173
    %v782 = vpop.f32.mrf.mxu0
    %v783 = vadd.f32 %v770, %v782
    %v784 = vpop.f32.mrf.mxu0
    %785 = vdwg.mxu0
    %786 = vmatpush.bf16.msra.mxu0 %v511
    %787 = vmatpush.bf16.msra.mxu0 %v505
    %788 = vmatpush.bf16.msra.mxu0 %v499
    %789 = vmatpush.bf16.msra.mxu0 %v493
    %790 = vmatpush.bf16.msra.mxu0 %v487
    %791 = vmatpush.bf16.msra.mxu0 %v481
    %792 = vmatpush.bf16.msra.mxu0 %v475
    %793 = vmatpush.bf16.msra.mxu0 %v469
    %794 = vmatmul.bf16.gmra.mxu0 %v172
    %v795 = vpop.f32.mrf.mxu0
    %v796 = vadd.f32 %v162, %v795
    %v797 = vpop.f32.mrf.mxu0
    %798 = vdwg.mxu0
    %799 = vmatpush.bf16.msra.mxu0 %v559
    %800 = vmatpush.bf16.msra.mxu0 %v553
    %801 = vmatpush.bf16.msra.mxu0 %v547
    %802 = vmatpush.bf16.msra.mxu0 %v541
    %803 = vmatpush.bf16.msra.mxu0 %v535
    %804 = vmatpush.bf16.msra.mxu0 %v529
    %805 = vmatpush.bf16.msra.mxu0 %v523
    %806 = vmatpush.bf16.msra.mxu0 %v517
    %807 = vmatmul.bf16.gmra.mxu0 %v173
    %v808 = vpop.f32.mrf.mxu0
    %v809 = vadd.f32 %v796, %v808
    %v810 = vpop.f32.mrf.mxu0
    %811 = vdwg.mxu0
    %812 = vmatpush.xpose.msra.mxu0 0.0
    %813 = vmatpush.xpose.msra.mxu0 0.0
    %814 = vmatpush.xpose.msra.mxu0 0.0
    %815 = vmatpush.xpose.msra.mxu0 0.0
    %816 = vmatpush.xpose.msra.mxu0 0.0
    %817 = vmatpush.xpose.msra.mxu0 0.0
    %818 = vmatpush.xpose.msra.mxu0 0.0
    %819 = vmatpush.xpose.msra.mxu0 0.0
    %820 = vmatpush.xpose.msra.mxu0 0.0
    %821 = vmatpush.xpose.msra.mxu0 0.0
    %822 = vmatpush.xpose.msra.mxu0 0.0
    %823 = vmatpush.xpose.msra.mxu0 0.0
    %824 = vmatpush.xpose.msra.mxu0 0.0
    %825 = vmatpush.xpose.msra.mxu0 0.0
    %826 = vmatpush.xpose.msra.mxu0 0.0
    %827 = vmatpush.xpose.msra.mxu0 %v731
    %828 = vmatmul.f32.gmra.mxu0 %v679
    %v829 = vpop.f32.mrf.mxu0
    %v830 = vadd.f32 0.0, %v829
    %831 = vdwg.mxu0
    %832 = vmatpush.xpose.msra.mxu0 0.0
    %833 = vmatpush.xpose.msra.mxu0 0.0
    %834 = vmatpush.xpose.msra.mxu0 0.0
    %835 = vmatpush.xpose.msra.mxu0 0.0
    %836 = vmatpush.xpose.msra.mxu0 0.0
    %837 = vmatpush.xpose.msra.mxu0 0.0
    %838 = vmatpush.xpose.msra.mxu0 0.0
    %839 = vmatpush.xpose.msra.mxu0 0.0
    %840 = vmatpush.xpose.msra.mxu0 0.0
    %841 = vmatpush.xpose.msra.mxu0 0.0
    %842 = vmatpush.xpose.msra.mxu0 0.0
    %843 = vmatpush.xpose.msra.mxu0 0.0
    %844 = vmatpush.xpose.msra.mxu0 0.0
    %845 = vmatpush.xpose.msra.mxu0 0.0
    %846 = vmatpush.xpose.msra.mxu0 0.0
    %847 = vmatpush.xpose.msra.mxu0 %v757
    %848 = vmatmul.f32.gmra.mxu0 %v705
    %v849 = vpop.f32.mrf.mxu0
    %v850 = vadd.f32 %v830, %v849
    %851 = vdwg.mxu0
    %v852 = vmul.f32 %v850, 0.083333336
    %vm853 = vcmask 64512
    %v854 = vsel %vm853, %v852, -inf
    %855 = vmax.xlane.f32.xlu0 %v854
    %v856 = vpop.xlane.xlu0 %855
    %v857 = vsub.f32 %v852, %v856
    %v858 = vmul.f32 %v857, 1.442695
    %v859 = vpow.pop %v858
    %v860 = vsel %vm853, %v859, 0.0
    %861 = vadd.xlane.f32.xlu0 %v860
    %v862 = vpop.xlane.xlu0 %861
    %v863 = vrcp.pop %v862
    %v864 = vmul.f32 %v862, %v863
    %v865 = vsub.f32 1.0, %v864
    %v866 = vmul.f32 %v863, %v865
    %v867 = vadd.f32 %v863, %v866
    %vm868 = vweird.f32 %v862
    %vm869 = vweird.f32 %v863
    %vm870 = vmor %vm868, %vm869
    %v871 = vsel %vm870, %v863, %v867
    %v872 = vand.u32 2147483647, %v862
    %vm873 = vcmp.eq.f32.partialorder %v872, 8.507059e+37
    %v874 = vand.u32 %v862, 2147483648
    %v875 = vor.u32 1.1754944e-38, %v874
    %v876 = vsel %vm873, %v875, %v871
    %v877 = vmul.f32 %v859, %v876
    %v879 = vsel %vm853, %v877, 0
    %881 = vmatpush.msra.mxu0 0.0
    %882 = vmatpush.msra.mxu0 0.0
    %883 = vmatpush.msra.mxu0 0.0
    %884 = vmatpush.msra.mxu0 0.0
    %885 = vmatpush.msra.mxu0 0.0
    %886 = vmatpush.msra.mxu0 0.0
    %887 = vmatpush.msra.mxu0 0.0
    %888 = vmatpush.msra.mxu0 0.0
    %889 = vmatpush.msra.mxu0 0.0
    %890 = vmatpush.msra.mxu0 0.0
    %891 = vmatpush.msra.mxu0 0.0
    %892 = vmatpush.msra.mxu0 0.0
    %893 = vmatpush.msra.mxu0 0.0
    %894 = vmatpush.msra.mxu0 0.0
    %895 = vmatpush.msra.mxu0 0.0
    %896 = vmatpush.msra.mxu0 %v783
    %897 = vmatmul.f32.gmra.mxu0 %v879
    %v898 = vpop.f32.mrf.mxu0
    %v899 = vadd.f32 0.0, %v898
    %900 = vdwg.mxu0
    %901 = vmatpush.msra.mxu0 0.0
    %902 = vmatpush.msra.mxu0 0.0
    %903 = vmatpush.msra.mxu0 0.0
    %904 = vmatpush.msra.mxu0 0.0
    %905 = vmatpush.msra.mxu0 0.0
    %906 = vmatpush.msra.mxu0 0.0
    %907 = vmatpush.msra.mxu0 0.0
    %908 = vmatpush.msra.mxu0 0.0
    %909 = vmatpush.msra.mxu0 0.0
    %910 = vmatpush.msra.mxu0 0.0
    %911 = vmatpush.msra.mxu0 0.0
    %912 = vmatpush.msra.mxu0 0.0
    %913 = vmatpush.msra.mxu0 0.0
    %914 = vmatpush.msra.mxu0 0.0
    %915 = vmatpush.msra.mxu0 0.0
    %916 = vmatpush.msra.mxu0 %v809
    %917 = vmatmul.f32.gmra.mxu0 %v879
    %v918 = vpop.f32.mrf.mxu0
    %v919 = vadd.f32 0.0, %v918
    %920 = vdwg.mxu0
    %v921 = vpack.c.bf16 %v899, %v899
    %v922 = vpack.c.bf16 %v919, %v919
    %v923 = vld [vmem:[#allocation4] sm:$0xff]
    %v924 = vld [vmem:[#allocation4 + $0x8] sm:$0xff]
    %v925 = vld [vmem:[#allocation4 + $0x10] sm:$0xff]
    %v926 = vld [vmem:[#allocation4 + $0x18] sm:$0xff]
    %v927 = vld [vmem:[#allocation4 + $0x20] sm:$0xff]
    %v928 = vld [vmem:[#allocation4 + $0x28] sm:$0xff]
    %v929 = vld [vmem:[#allocation4 + $0x30] sm:$0xff]
    %v930 = vld [vmem:[#allocation4 + $0x38] sm:$0xff]
    %v931 = vld [vmem:[#allocation4 + $0x40] sm:$0xff]
    %v932 = vld [vmem:[#allocation4 + $0x48] sm:$0xff]
    %v933 = vld [vmem:[#allocation4 + $0x50] sm:$0xff]
    %v934 = vld [vmem:[#allocation4 + $0x58] sm:$0xff]
    %v935 = vld [vmem:[#allocation4 + $0x60] sm:$0xff]
    %v936 = vld [vmem:[#allocation4 + $0x68] sm:$0xff]
    %v937 = vld [vmem:[#allocation4 + $0x70] sm:$0xff]
    %v938 = vld [vmem:[#allocation4 + $0x78] sm:$0xff]
    %v939 = vld [vmem:[#allocation4 + $0x80] sm:$0xff]
    %v940 = vld [vmem:[#allocation4 + $0x88] sm:$0xff]
    %v941 = vld [vmem:[#allocation4 + $0x90] sm:$0xff]
    %v942 = vld [vmem:[#allocation4 + $0x98] sm:$0xff]
    %v943 = vld [vmem:[#allocation4 + $0xa0] sm:$0xff]
    %v944 = vld [vmem:[#allocation4 + $0xa8] sm:$0xff]
    %v945 = vld [vmem:[#allocation4 + $0xb0] sm:$0xff]
    %v946 = vld [vmem:[#allocation4 + $0xb8] sm:$0xff]
    %v947 = vld [vmem:[#allocation4 + $0xc0] sm:$0xff]
    %v948 = vld [vmem:[#allocation4 + $0xc8] sm:$0xff]
    %v949 = vld [vmem:[#allocation4 + $0xd0] sm:$0xff]
    %v950 = vld [vmem:[#allocation4 + $0xd8] sm:$0xff]
    %v951 = vld [vmem:[#allocation4 + $0xe0] sm:$0xff]
    %v952 = vld [vmem:[#allocation4 + $0xe8] sm:$0xff]
    %v953 = vld [vmem:[#allocation4 + $0xf0] sm:$0xff]
    %v954 = vld [vmem:[#allocation4 + $0xf8] sm:$0xff]
    %v955 = vld [vmem:[%s4] sm:$0x3]
    %v957 = vperm.slane %v955, 0
    %v991 = vunpack.c.l.b16 %v923
    %v992 = vunpack.c.l.b16 %v924
    %v993 = vunpack.c.l.b16 %v925
    %v994 = vunpack.c.l.b16 %v926
    %v995 = vunpack.c.l.b16 %v927
    %v996 = vunpack.c.l.b16 %v928
    %v997 = vunpack.c.l.b16 %v929
    %v998 = vunpack.c.l.b16 %v930
    %v999 = vunpack.c.l.b16 %v931
    %v1000 = vunpack.c.l.b16 %v932
    %v1001 = vunpack.c.l.b16 %v933
    %v1002 = vunpack.c.l.b16 %v934
    %v1003 = vunpack.c.l.b16 %v935
    %v1004 = vunpack.c.l.b16 %v936
    %v1005 = vunpack.c.l.b16 %v937
    %v1006 = vunpack.c.l.b16 %v938
    %v1007 = vunpack.c.l.b16 %v939
    %v1008 = vunpack.c.l.b16 %v940
    %v1009 = vunpack.c.l.b16 %v941
    %v1010 = vunpack.c.l.b16 %v942
    %v1011 = vunpack.c.l.b16 %v943
    %v1012 = vunpack.c.l.b16 %v944
    %v1013 = vunpack.c.l.b16 %v945
    %v1014 = vunpack.c.l.b16 %v946
    %v1015 = vunpack.c.l.b16 %v947
    %v1016 = vunpack.c.l.b16 %v948
    %v1017 = vunpack.c.l.b16 %v949
    %v1018 = vunpack.c.l.b16 %v950
    %v1019 = vunpack.c.l.b16 %v951
    %v1020 = vunpack.c.l.b16 %v952
    %v1021 = vunpack.c.l.b16 %v953
    %v1022 = vunpack.c.l.b16 %v954
    %v1023 = vpack.c.b16 %v992, %v991
    %v1024 = vpack.c.b16 %v994, %v993
    %v1025 = vpack.c.b16 %v996, %v995
    %v1026 = vpack.c.b16 %v998, %v997
    %v1027 = vpack.c.b16 %v1000, %v999
    %v1028 = vpack.c.b16 %v1002, %v1001
    %v1029 = vpack.c.b16 %v1004, %v1003
    %v1030 = vpack.c.b16 %v1006, %v1005
    %v1031 = vpack.c.b16 %v1008, %v1007
    %v1032 = vpack.c.b16 %v1010, %v1009
    %v1033 = vpack.c.b16 %v1012, %v1011
    %v1034 = vpack.c.b16 %v1014, %v1013
    %v1035 = vpack.c.b16 %v1016, %v1015
    %v1036 = vpack.c.b16 %v1018, %v1017
    %v1037 = vpack.c.b16 %v1020, %v1019
    %v1038 = vpack.c.b16 %v1022, %v1021
    %1055 = vmatpush.bf16.msra.mxu0 %v1030
    %1056 = vmatpush.bf16.msra.mxu0 %v1029
    %1057 = vmatpush.bf16.msra.mxu0 %v1028
    %1058 = vmatpush.bf16.msra.mxu0 %v1027
    %1059 = vmatpush.bf16.msra.mxu0 %v1026
    %1060 = vmatpush.bf16.msra.mxu0 %v1025
    %1061 = vmatpush.bf16.msra.mxu0 %v1024
    %1062 = vmatpush.bf16.msra.mxu0 %v1023
    %1063 = vmatmul.bf16.gmra.mxu0 %v921
    %v1064 = vpop.f32.mrf.mxu0
    %v1065 = vadd.f32 %v957, %v1064
    %v1066 = vpop.f32.mrf.mxu0
    %1067 = vdwg.mxu0
    %1068 = vmatpush.bf16.msra.mxu0 %v1038
    %1069 = vmatpush.bf16.msra.mxu0 %v1037
    %1070 = vmatpush.bf16.msra.mxu0 %v1036
    %1071 = vmatpush.bf16.msra.mxu0 %v1035
    %1072 = vmatpush.bf16.msra.mxu0 %v1034
    %1073 = vmatpush.bf16.msra.mxu0 %v1033
    %1074 = vmatpush.bf16.msra.mxu0 %v1032
    %1075 = vmatpush.bf16.msra.mxu0 %v1031
    %1076 = vmatmul.bf16.gmra.mxu0 %v922
    %v1077 = vpop.f32.mrf.mxu0
    %v1078 = vadd.f32 %v1065, %v1077
    %v1079 = vpop.f32.mrf.mxu0
    %1080 = vdwg.mxu0
    %v1081 = vmax.f32 %v1078, 0.0
    %v1082 = vand.u32 2147483647, %v1081
    %vm1083 = vcmp.le.f32.partialorder %v1082, 0.7853982
    %vm1084 = vcmp.lt.s32.totalorder %v1081, 0
    %v1085 = vand.u32 %v1081, 2139095040
    %v1086 = vshrl.u32 %v1085, 23
    %v1087 = vsub.s32 %v1086, 127
    %v1088 = vand.u32 2147483647, %v1081
    %v1089 = vand.u32 %v1088, 8388607
    %v1090 = vor.u32 %v1089, 8388608
    %v1091 = vsub.s32 0, %v1090
    %v1092 = vadd.s32 %v1087, 1
    %vm1093 = vcmp.gt.s32.totalorder %v1092, 0
    %v1094 = vsel %vm1093, %v1092, 0
    %v1095 = vshrl.u32 %v1094, 5
    %v1096 = vand.u32 %v1094, 31
    %v1097 = vsub.s32 32, %v1096
    %v1098 = vshrl.u32 683565275, %v1097
    %v1099 = vshll.u32 683565275, %v1096
    %v1100 = vshrl.u32 2475754826, %v1097
    %v1101 = vor.u32 %v1099, %v1100
    %v1102 = vshll.u32 2475754826, %v1096
    %v1103 = vshrl.u32 2131351028, %v1097
    %v1104 = vor.u32 %v1102, %v1103
    %v1105 = vshll.u32 2131351028, %v1096
    %v1106 = vshrl.u32 2102212464, %v1097
    %v1107 = vor.u32 %v1105, %v1106
    %v1108 = vshll.u32 2102212464, %v1096
    %v1109 = vshrl.u32 920167782, %v1097
    %v1110 = vor.u32 %v1108, %v1109
    %v1111 = vshll.u32 920167782, %v1096
    %v1112 = vshrl.u32 1326507024, %v1097
    %v1113 = vor.u32 %v1111, %v1112
    %vm1114 = vcmp.lt.s32.totalorder %v1095, 1
    %vm1115 = vcmp.lt.s32.totalorder %v1095, 2
    %vm1116 = vcmp.lt.s32.totalorder %v1095, 3
    %vm1117 = vcmp.lt.s32.totalorder %v1095, 4
    %v1118 = vsel %vm1114, %v1098, %v1101
    %v1119 = vsel %vm1117, %v1107, 2102212464
    %v1120 = vsel %vm1116, %v1104, %v1119
    %v1121 = vsel %vm1115, %v1118, %v1120
    %v1122 = vsel %vm1114, %v1101, %v1104
    %v1123 = vsel %vm1117, %v1110, 920167782
    %v1124 = vsel %vm1116, %v1107, %v1123
    %v1125 = vsel %vm1115, %v1122, %v1124
    %v1126 = vsel %vm1114, %v1104, %v1107
    %v1127 = vsel %vm1117, %v1113, 1326507024
    %v1128 = vsel %vm1116, %v1110, %v1127
    %v1129 = vsel %vm1115, %v1126, %v1128
    %v1130 = vshll.u32 %v1090, 8
    %v1131 = vand.u32 %v1130, 65535
    %v1132 = vshrl.u32 %v1130, 16
    %v1133 = vand.u32 %v1129, 65535
    %v1134 = vshrl.u32 %v1129, 16
    %v1135 = vmul.u32 %v1131, %v1133
    %v1136 = vmul.u32 %v1131, %v1134
    %v1137 = vmul.u32 %v1132, %v1133
    %v1138 = vmul.u32 %v1132, %v1134
    %v1139 = vshll.u32 %v1136, 16
    %v1140 = vshrl.u32 %v1136, 16
    %v1141 = vshll.u32 %v1137, 16
    %v1142 = vshrl.u32 %v1137, 16
    %vm1143 = vc.u32 %v1135, %v1139
    %v1144 = vsel %vm1143, 1, 0
    %v1145 = vadd.s32 %v1135, %v1139
    %v1146 = vadd.s32 %v1138, %v1144
    %vm1147 = vc.u32 %v1145, %v1141
    %v1148 = vsel %vm1147, 1, 0
    %v1149 = vadd.s32 %v1145, %v1141
    %v1150 = vadd.s32 %v1146, %v1148
    %v1151 = vadd.s32 %v1150, %v1140
    %v1152 = vadd.s32 %v1151, %v1142
    %v1153 = vand.u32 %v1130, 65535
    %v1154 = vshrl.u32 %v1130, 16
    %v1155 = vand.u32 %v1125, 65535
    %v1156 = vshrl.u32 %v1125, 16
    %v1157 = vmul.u32 %v1153, %v1155
    %v1158 = vmul.u32 %v1153, %v1156
    %v1159 = vmul.u32 %v1154, %v1155
    %v1160 = vmul.u32 %v1154, %v1156
    %v1161 = vshll.u32 %v1158, 16
    %v1162 = vshrl.u32 %v1158, 16
    %v1163 = vshll.u32 %v1159, 16
    %v1164 = vshrl.u32 %v1159, 16
    %vm1165 = vc.u32 %v1157, %v1161
    %v1166 = vsel %vm1165, 1, 0
    %v1167 = vadd.s32 %v1157, %v1161
    %v1168 = vadd.s32 %v1160, %v1166
    %vm1169 = vc.u32 %v1167, %v1163
    %v1170 = vsel %vm1169, 1, 0
    %v1171 = vadd.s32 %v1167, %v1163
    %v1172 = vadd.s32 %v1168, %v1170
    %v1173 = vadd.s32 %v1172, %v1162
    %v1174 = vadd.s32 %v1173, %v1164
    %v1175 = vmul.u32 %v1130, %v1121
    %v1176 = vadd.s32 %v1152, %v1171
    %vm1177 = vc.u32 %v1152, %v1171
    %v1178 = vadd.s32 %v1174, 1
    %v1179 = vsel %vm1177, %v1178, %v1174
    %v1180 = vadd.s32 %v1175, %v1179
    %v1181 = vadd.s32 %v1180, 536870912
    %v1182 = vshrl.u32 %v1181, 30
    %v1183 = vshll.u32 %v1182, 30
    %v1184 = vsub.s32 %v1180, %v1183
    %vm1185 = vcmp.lt.s32.totalorder %v1184, 0
    %v1186 = vsub.s32 0, %v1184
    %v1187 = vsel %vm1185, %v1186, %v1184
    %v1188 = vclz %v1187
    %v1189 = vsub.s32 %v1188, 2
    %vm1190 = vcmp.gt.s32.totalorder 0, %v1189
    %v1191 = vsel %vm1190, 0, %v1189
    %v1192 = vsub.s32 32, %v1191
    %v1193 = vshll.u32 %v1184, %v1191
    %v1194 = vshrl.u32 %v1176, %v1192
    %v1195 = vor.u32 %v1193, %v1194
    %v1196 = vsub.s32 4294967266, %v1191
    %v1197 = vadd.s32 %v1196, 127
    %v1198 = vshll.u32 %v1197, 23
    %v1199 = vor.u32 4788187, %v1198
    %v1200 = vand.u32 2147483647, %v1199
    %v1202 = vcvt.s32.f32 %v1195
    %v1203 = vmul.f32 %v1202, %v1200
    %v1204 = vxor.u32 %v1203, 2147483648
    %v1205 = vsel %vm1084, %v1204, %v1203
    %v1206 = vsub.s32 4, %v1182
    %v1207 = vsel %vm1084, %v1206, %v1182
    %v1208 = vsel %vm1083, %v1081, %v1205
    %v1209 = vsel %vm1083, 0, %v1207
    %v1210 = vmul.f32 %v1208, %v1208
    %v1211 = vmul.f32 %v1210, -0.001358992
    %v1212 = vadd.f32 %v1211, 0.041655596
    %v1213 = vmul.f32 %v1210, %v1212
    %v1214 = vadd.f32 %v1213, -0.4999988
    %v1215 = vmul.f32 %v1210, %v1214
    %v1216 = vadd.f32 1.0, %v1215
    %v1217 = vmul.f32 %v1208, %v1208
    %v1218 = vmul.f32 %v1217, -0.00019511016
    %v1219 = vadd.f32 %v1218, 0.008332121
    %v1220 = vmul.f32 %v1217, %v1219
    %v1221 = vadd.f32 %v1220, -0.16666654
    %v1222 = vmul.f32 %v1217, %v1221
    %v1223 = vadd.f32 %v1222, 1.0
    %v1224 = vmul.f32 %v1223, %v1208
    %vm1225 = vweird.f32 %v1081
    %v1226 = vand.u32 %v1209, 3
    %vm1227 = vcmp.lt.s32.totalorder %v1226, 2
    %vm1228 = vcmp.eq.s32.totalorder %v1226, 0
    %v1229 = vxor.u32 %v1224, 2147483648
    %v1230 = vsel %vm1228, %v1216, %v1229
    %vm1231 = vcmp.eq.s32.totalorder %v1226, 2
    %v1232 = vxor.u32 %v1216, 2147483648
    %v1233 = vsel %vm1231, %v1232, %v1224
    %v1234 = vsel %vm1227, %v1230, %v1233
    %v1235 = vsel %vm1225, nan, %v1234
    %1237 = vrot.lane.b32.xlu0 %v1235, 127
    %v1238 = vpop.permute.xlu0 %1237
    %v1240 = vmul.f32 %v1235, %v1238
    %1241 = vrot.lane.b32.xlu0 %v1235, 126
    %v1242 = vpop.permute.xlu0 %1241
    %v1244 = vmul.f32 %v1240, %v1242
    %1245 = vrot.lane.b32.xlu0 %v1235, 125
    %v1246 = vpop.permute.xlu0 %1245
    %v1248 = vmul.f32 %v1244, %v1246
    %v1249 = vld [vmem:[%s5] sm:$0xff]
    %v1250 = vld [vmem:[%s6] sm:$0x1]
    %1251 = vset.pattern.permute.xlu0 0
    %1252 = vperm.xlu0 %1251, %v1235
    %v1253 = vpop.permute.xlu0 %1252
    %v1255 = vperm.slane %v1249, 0
    %v1256 = vmul.f32 %v1253, %v1255
    %v1258 = vperm.slane %v1250, 0
    %v1260 = vadd.f32 %v1258, %v1256
    %1262 = vset.pattern.permute.xlu0 0
    %1263 = vperm.xlu0 %1262, %v1240
    %v1264 = vpop.permute.xlu0 %1263
    %v1266 = vperm.slane %v1249, 1
    %v1267 = vmul.f32 %v1264, %v1266
    %v1268 = vadd.f32 %v1260, %v1267
    %1270 = vset.pattern.permute.xlu0 0
    %1271 = vperm.xlu0 %1270, %v1244
    %v1272 = vpop.permute.xlu0 %1271
    %v1274 = vperm.slane %v1249, 2
    %v1275 = vmul.f32 %v1272, %v1274
    %v1276 = vadd.f32 %v1268, %v1275
    %1278 = vset.pattern.permute.xlu0 0
    %1279 = vperm.xlu0 %1278, %v1248
    %v1280 = vpop.permute.xlu0 %1279
    %v1282 = vperm.slane %v1249, 3
    %v1283 = vmul.f32 %v1280, %v1282
    %v1284 = vadd.f32 %v1276, %v1283
    %1285 = vst [vmem:[%s7] sm:$0xff] %v1284
    // Predicated region
    $region38: #{quantum_attention_net.1} parent=1 // pred_check
      _
    $region39: #{quantum_attention_net.1} parent=1 // pred_check_branch
      %1287 = sbr.rel (0) target = $region41
    $region40: #{quantum_attention_net.1} parent=1 // pred_region
      _
    $region41: #{quantum_attention_net.1} parent=1 // pred_fallthru
      _
    // Predicated region
    $region42: #{quantum_attention_net.1} parent=1 // pred_check
      _
    $region43: #{quantum_attention_net.1} parent=1 // pred_check_branch
      %1289 = sbr.rel (0) target = $region45
    $region44: #{quantum_attention_net.1} parent=1 // pred_region
      _
    $region45: #{quantum_attention_net.1} parent=1 // pred_fallthru
      _
    %1290 = vsyncpa [#allocation3], 1
    %1291 = vsyncpa [#allocation5], 1

</llo_original>
